<compile_context>
chip_gen: v7x
topology: tpu7x:2x2x1
jax: 0.10.0
libtpu: 0.0.40
codegen_flags: <defaults>
</compile_context>

<pallas_src>
import jax
import jax.numpy as jnp
from jax.experimental import pallas as pl
from jax.experimental.pallas import tpu as pltpu

TREAT_DIM = 64


def _round_up(v, m):
    return (v + m - 1) // m * m


def _make_kernel(ind, outd, degree, knots, islastlayer, has_bias):
    d = degree + 1 + len(knots)

    def body(x_ref, w_ref, bias_ref, out_ref):
        x = x_ref[...]                                  # [T, 64+ind]
        x_treat = x[:, :TREAT_DIM]                      # [T, 64]

        # Truncated-power basis of the per-row treatment mean (each col [T,1]).
        t = jnp.mean(x_treat, axis=-1, keepdims=True)
        cols = [jnp.ones_like(t)]
        for j in range(1, degree + 1):
            cols.append(t ** j)
        for knot in knots:
            cols.append(jnp.maximum(t - knot, 0.0) ** degree)

        # Single MXU contraction.  The first TREAT_DIM rows of w_ref are zero,
        # so the whole x block is fed (no lane-repack of x_feature):
        #   y[n, k*outd + o] = sum_i x_feature[n, i] * weight[i, o, k]
        y = jnp.dot(x, w_ref[...], preferred_element_type=jnp.float32)  # [T, d*outd]

        # Tiny epilogue: out[:, o] = sum_k cols[k] * (y[:, k*outd+o] + bias[o, k])
        out = None
        for k in range(d):
            chunk = y[:, k * outd:(k + 1) * outd]       # [T, outd]
            if has_bias:
                chunk = chunk + bias_ref[k:k + 1, :]    # broadcast [1, outd]
            term = cols[k] * chunk
            out = term if out is None else out + term
        out = jnp.maximum(out, 0.0)                     # act='relu'

        if islastlayer:
            out_ref[...] = out.astype(out_ref.dtype)
        else:
            # Fused concat([x_treat, out], 1) — single lane-dense store.
            out_ref[...] = jnp.concatenate(
                [x_treat.astype(out_ref.dtype), out.astype(out_ref.dtype)],
                axis=-1)

    if has_bias:
        return body
    return lambda x_ref, w_ref, out_ref: body(x_ref, w_ref, None, out_ref)


def dynamic_fc_forward(x, weight, bias, degree, knots, islastlayer=0, tile_n=None):
    """x: [N, 64+ind]; weight: [ind, outd, d]; bias: [outd, d] or None."""
    N = x.shape[0]
    ind, outd, d = weight.shape
    assert degree >= 1, "Truncated_power requires degree >= 1"
    assert x.shape[1] == TREAT_DIM + ind
    assert d == degree + 1 + len(knots)
    has_bias = bias is not None

    # Fold weight into a single 2-D contraction matrix over the whole row:
    #   w_full[TREAT_DIM + i, k*outd + o] = weight[i, o, k]; top 64 rows zero.
    w2 = jnp.transpose(weight, (0, 2, 1)).reshape(ind, d * outd).astype(jnp.float32)
    w_full = jnp.concatenate(
        [jnp.zeros((TREAT_DIM, d * outd), jnp.float32), w2], axis=0)
    bias_t = jnp.transpose(bias).astype(jnp.float32) if has_bias else None  # [d, outd]

    # Batch tiling: biggest block that makes sense (mem-bound kernel), but keep
    # >= 2 grid steps when the batch allows it so v7x's two TCs both get work.
    n_pad8 = _round_up(max(N, 8), 8)
    if tile_n is None:
        tile_n = 1024
        if n_pad8 >= 256:
            tile_n = min(tile_n, _round_up(pl.cdiv(n_pad8, 2), 8))
    tile_n = min(_round_up(tile_n, 8), n_pad8)
    n_pad = _round_up(N, tile_n)

    x_p = x.astype(jnp.float32)
    if n_pad != N:
        # Padded rows give harmless (nonzero, relu'd) outputs; sliced off below.
        x_p = jnp.pad(x_p, ((0, n_pad - N), (0, 0)))

    out_cols = outd if islastlayer else TREAT_DIM + outd
    kernel = _make_kernel(ind, outd, degree, tuple(knots), islastlayer, has_bias)

    in_specs = [
        pl.BlockSpec((tile_n, TREAT_DIM + ind), lambda i: (i, 0)),
        pl.BlockSpec((TREAT_DIM + ind, d * outd), lambda i: (0, 0)),  # resident
    ]
    operands = [x_p, w_full]
    if has_bias:
        in_specs.append(pl.BlockSpec((d, outd), lambda i: (0, 0)))    # resident
        operands.append(bias_t)

    out = pl.pallas_call(
        kernel,
        out_shape=jax.ShapeDtypeStruct((n_pad, out_cols), jnp.float32),
        grid=(n_pad // tile_n,),
        in_specs=in_specs,
        out_specs=pl.BlockSpec((tile_n, out_cols), lambda i: (i, 0)),
        compiler_params=pltpu.CompilerParams(
            dimension_semantics=("parallel",)),
    )(*operands)

    if n_pad != N:
        out = out[:N]
    return out


# ----------------------------- pure-JAX reference -----------------------------

def truncated_power_basis(t, degree, knots):
    cols = []
    for j in range(degree + 1 + len(knots)):
        if j == 0:
            cols.append(jnp.ones_like(t))
        elif j <= degree:
            cols.append(t ** j)
        else:
            cols.append(jnp.maximum(t - knots[j - degree - 1], 0.0) ** degree)
    return jnp.stack(cols, axis=1)


def reference_forward(x, weight, bias, degree, knots, islastlayer=0):
    x_treat = x[:, :TREAT_DIM]
    x_feature = x[:, TREAT_DIM:]
    t = jnp.mean(x_treat, axis=-1)
    basis = truncated_power_basis(t, degree, knots)            # [N, d]
    xfw = jnp.einsum("ni,iok->nok", x_feature, weight)
    out = jnp.sum(xfw * basis[:, None, :], axis=2)
    if bias is not None:
        out = out + basis @ bias.T
    out = jnp.maximum(out, 0.0)
    if not islastlayer:
        out = jnp.concatenate([x_treat, out], axis=1)
    return out


if __name__ == "__main__":
    # Module config consistent with Dynamic_FC defaults:
    # power basis, relu act, isbias=1, islastlayer=0.
    ind, outd = 32, 16
    degree = 2
    knots = (0.33, 0.66)
    d = degree + 1 + len(knots)          # = 5
    N = 300                              # exercises 2-step grid + row padding

    key = jax.random.PRNGKey(0)
    k_x, k_w, k_b = jax.random.split(key, 3)

    weight = jax.random.uniform(k_w, (ind, outd, d), dtype=jnp.float32)
    bias = jax.random.uniform(k_b, (outd, d), dtype=jnp.float32)
    x = jax.random.uniform(k_x, (N, TREAT_DIM + ind), dtype=jnp.float32)

    out = dynamic_fc_forward(x, weight, bias, degree, knots, islastlayer=0)
    out = jax.block_until_ready(out)

    ref = reference_forward(x, weight, bias, degree, knots, islastlayer=0)
    assert out.shape == (N, TREAT_DIM + outd), out.shape
    max_err = float(jnp.max(jnp.abs(out - ref)))
    assert jnp.allclose(out, ref, atol=1e-3, rtol=1e-3), max_err

    print("KERNEL_OK")
</pallas_src>

<mosaic_0001>
module attributes {stable_mosaic.version = 11 : i64} {
  func.func @body(%arg0: i32, %arg1: memref<152x96xf32, #tpu.memory_space<vmem>>, %arg2: memref<96x80xf32, #tpu.memory_space<vmem>>, %arg3: memref<5x16xf32, #tpu.memory_space<vmem>>, %arg4: memref<152x80xf32, #tpu.memory_space<vmem>>) attributes {dimension_semantics = [#tpu.dimension_semantics<parallel>], iteration_bounds = array<i64: 2>, scalar_prefetch = 0 : i64, scratch_operands = 0 : i64, tpu.core_type = #tpu.core_type<tc>, window_params = [{transform_indices = @transform_0, window_bounds = array<i64: 152, 96>}, {pipeline_mode = #tpu.pipeline_mode<synchronous>, transform_indices = @transform_1, window_bounds = array<i64: 96, 80>}, {pipeline_mode = #tpu.pipeline_mode<synchronous>, transform_indices = @transform_2, window_bounds = array<i64: 5, 16>}, {transform_indices = @transform_3, window_bounds = array<i64: 152, 80>}]} {
    %c0 = arith.constant 0 : index
    %c0_0 = arith.constant 0 : index
    %0 = vector.load %arg1[%c0, %c0_0] : memref<152x96xf32, #tpu.memory_space<vmem>>, vector<152x96xf32>
    %1 = vector.extract_strided_slice %0 {offsets = [0, 0], sizes = [152, 64], strides = [1, 1]} : vector<152x96xf32> to vector<152x64xf32>
    %cst = arith.constant dense<0.000000e+00> : vector<152xf32>
    %2 = vector.multi_reduction <add>, %1, %cst [1] : vector<152x64xf32> to vector<152xf32>
    %3 = vector.shape_cast %2 : vector<152xf32> to vector<152x1xf32>
    %cst_1 = arith.constant 6.400000e+01 : f32
    %4 = vector.broadcast %cst_1 : f32 to vector<152x1xf32>
    %5 = arith.divf %3, %4 : vector<152x1xf32>
    %cst_2 = arith.constant 1.000000e+00 : f32
    %6 = vector.broadcast %cst_2 : f32 to vector<152x1xf32>
    %7 = arith.mulf %5, %5 : vector<152x1xf32>
    %cst_3 = arith.constant 3.300000e-01 : f32
    %8 = vector.broadcast %cst_3 : f32 to vector<152x1xf32>
    %9 = arith.subf %5, %8 : vector<152x1xf32>
    %cst_4 = arith.constant 0.000000e+00 : f32
    %10 = vector.broadcast %cst_4 : f32 to vector<152x1xf32>
    %11 = arith.maximumf %9, %10 : vector<152x1xf32>
    %12 = arith.mulf %11, %11 : vector<152x1xf32>
    %cst_5 = arith.constant 6.600000e-01 : f32
    %13 = vector.broadcast %cst_5 : f32 to vector<152x1xf32>
    %14 = arith.subf %5, %13 : vector<152x1xf32>
    %cst_6 = arith.constant 0.000000e+00 : f32
    %15 = vector.broadcast %cst_6 : f32 to vector<152x1xf32>
    %16 = arith.maximumf %14, %15 : vector<152x1xf32>
    %17 = arith.mulf %16, %16 : vector<152x1xf32>
    %c0_7 = arith.constant 0 : index
    %c0_8 = arith.constant 0 : index
    %18 = vector.load %arg2[%c0_7, %c0_8] : memref<96x80xf32, #tpu.memory_space<vmem>>, vector<96x80xf32>
    %cst_9 = arith.constant dense<0.000000e+00> : vector<152x80xf32>
    %19 = tpu.matmul %0, %18, %cst_9 {dimension_numbers = #tpu.dot_dimension_numbers<[1], [0], [0], [1], [0, 0, 1, 1], [], []>} : vector<152x96xf32>, vector<96x80xf32>, vector<152x80xf32> -> vector<152x80xf32>
    %20 = vector.extract_strided_slice %19 {offsets = [0, 0], sizes = [152, 16], strides = [1, 1]} : vector<152x80xf32> to vector<152x16xf32>
    %c0_10 = arith.constant 0 : index
    %c0_11 = arith.constant 0 : index
    %21 = vector.load %arg3[%c0_10, %c0_11] : memref<5x16xf32, #tpu.memory_space<vmem>>, vector<1x16xf32>
    %22 = vector.broadcast %21 : vector<1x16xf32> to vector<152x16xf32>
    %23 = arith.addf %20, %22 : vector<152x16xf32>
    %24 = vector.broadcast %6 : vector<152x1xf32> to vector<152x16xf32>
    %25 = arith.mulf %24, %23 : vector<152x16xf32>
    %26 = vector.extract_strided_slice %19 {offsets = [0, 16], sizes = [152, 16], strides = [1, 1]} : vector<152x80xf32> to vector<152x16xf32>
    %c1 = arith.constant 1 : index
    %c0_12 = arith.constant 0 : index
    %27 = vector.load %arg3[%c1, %c0_12] : memref<5x16xf32, #tpu.memory_space<vmem>>, vector<1x16xf32>
    %28 = vector.broadcast %27 : vector<1x16xf32> to vector<152x16xf32>
    %29 = arith.addf %26, %28 : vector<152x16xf32>
    %30 = vector.broadcast %5 : vector<152x1xf32> to vector<152x16xf32>
    %31 = arith.mulf %30, %29 : vector<152x16xf32>
    %32 = arith.addf %25, %31 : vector<152x16xf32>
    %33 = vector.extract_strided_slice %19 {offsets = [0, 32], sizes = [152, 16], strides = [1, 1]} : vector<152x80xf32> to vector<152x16xf32>
    %c2 = arith.constant 2 : index
    %c0_13 = arith.constant 0 : index
    %34 = vector.load %arg3[%c2, %c0_13] : memref<5x16xf32, #tpu.memory_space<vmem>>, vector<1x16xf32>
    %35 = vector.broadcast %34 : vector<1x16xf32> to vector<152x16xf32>
    %36 = arith.addf %33, %35 : vector<152x16xf32>
    %37 = vector.broadcast %7 : vector<152x1xf32> to vector<152x16xf32>
    %38 = arith.mulf %37, %36 : vector<152x16xf32>
    %39 = arith.addf %32, %38 : vector<152x16xf32>
    %40 = vector.extract_strided_slice %19 {offsets = [0, 48], sizes = [152, 16], strides = [1, 1]} : vector<152x80xf32> to vector<152x16xf32>
    %c3 = arith.constant 3 : index
    %c0_14 = arith.constant 0 : index
    %41 = vector.load %arg3[%c3, %c0_14] : memref<5x16xf32, #tpu.memory_space<vmem>>, vector<1x16xf32>
    %42 = vector.broadcast %41 : vector<1x16xf32> to vector<152x16xf32>
    %43 = arith.addf %40, %42 : vector<152x16xf32>
    %44 = vector.broadcast %12 : vector<152x1xf32> to vector<152x16xf32>
    %45 = arith.mulf %44, %43 : vector<152x16xf32>
    %46 = arith.addf %39, %45 : vector<152x16xf32>
    %47 = vector.extract_strided_slice %19 {offsets = [0, 64], sizes = [152, 16], strides = [1, 1]} : vector<152x80xf32> to vector<152x16xf32>
    %c4 = arith.constant 4 : index
    %c0_15 = arith.constant 0 : index
    %48 = vector.load %arg3[%c4, %c0_15] : memref<5x16xf32, #tpu.memory_space<vmem>>, vector<1x16xf32>
    %49 = vector.broadcast %48 : vector<1x16xf32> to vector<152x16xf32>
    %50 = arith.addf %47, %49 : vector<152x16xf32>
    %51 = vector.broadcast %17 : vector<152x1xf32> to vector<152x16xf32>
    %52 = arith.mulf %51, %50 : vector<152x16xf32>
    %53 = arith.addf %46, %52 : vector<152x16xf32>
    %cst_16 = arith.constant 0.000000e+00 : f32
    %54 = vector.broadcast %cst_16 : f32 to vector<152x16xf32>
    %55 = arith.maximumf %53, %54 : vector<152x16xf32>
    %56 = tpu.concatenate %1, %55 in 1 : vector<152x64xf32>, vector<152x16xf32> -> vector<152x80xf32>
    %c0_17 = arith.constant 0 : index
    %c0_18 = arith.constant 0 : index
    %57 = vector.load %arg4[%c0_17, %c0_18] : memref<152x80xf32, #tpu.memory_space<vmem>>, vector<152x80xf32>
    tpu.vector_store %arg4[%c0_17, %c0_18], %56 {strides = array<i32>} : memref<152x80xf32, #tpu.memory_space<vmem>>, vector<152x80xf32>,
    return
  }
  func.func @transform_0(%arg0: i32) -> (i32, i32) {
    %c0_i32 = arith.constant 0 : i32
    %c0_i32_0 = arith.constant 0 : i32
    return %arg0, %c0_i32 : i32, i32
  }
  func.func @transform_1(%arg0: i32) -> (i32, i32) {
    %c0_i32 = arith.constant 0 : i32
    %c0_i32_0 = arith.constant 0 : i32
    %c0_i32_1 = arith.constant 0 : i32
    return %c0_i32, %c0_i32_0 : i32, i32
  }
  func.func @transform_2(%arg0: i32) -> (i32, i32) {
    %c0_i32 = arith.constant 0 : i32
    %c0_i32_0 = arith.constant 0 : i32
    %c0_i32_1 = arith.constant 0 : i32
    return %c0_i32, %c0_i32_0 : i32, i32
  }
  func.func @transform_3(%arg0: i32) -> (i32, i32) {
    %c0_i32 = arith.constant 0 : i32
    %c0_i32_0 = arith.constant 0 : i32
    return %arg0, %c0_i32 : i32, i32
  }
}

</mosaic_0001>

<llo_original>
// kernel: tpu_custom_call.1
$region0: #{tpu_custom_call.1}
  #allocation0 [shape = 'u32[]', space=smem, size = 0x4, offset = 0x4, fixed_abs, tag = 'smem constant byte address 0x4 - core index']
  #allocation1 [shape = 'u32[144,128]{1,0:T(1,128)}', space=vmem, size = 0x12000, scoped, tag = 'internal scratch']
  %s0 = inlined_call_operand.vmem [shape: f32[304,96], index: 0, kind: input, shape index: {}]
  %s1 = inlined_call_operand.vmem [shape: f32[96,80], index: 1, kind: input, shape index: {}]
  %s2 = inlined_call_operand.vmem [shape: f32[5,16], index: 2, kind: input, shape index: {}]
  %s3 = inlined_call_operand.vmem [shape: f32[304,80], index: 3, kind: output, shape index: {}]
  %s4 = sld [smem:[#allocation0]]
  $region45: #{tpu_custom_call.1} parent=0
    _
  %s6 = ssub.s32 1, %s4
  %s7 = scalar_select 0, %s6, %s4
  loop: start=0, step=1, limit=4
  $region2: #{tpu_custom_call.1} parent=0 // loop_pre_header
    _
  $region3: #{tpu_custom_call.1} parent=0 // loop_header
    %s9 = sphi 0, %s13
    %p10 = scmp.ge.s32.totalorder %s9, 4
    %s19 = sphi 0, %s21
    %s22 = sphi 0, %s19
    %s23 = sphi 0, %s22
    %s39 = sphi 0, %s23
    %s43 = sphi 0, %s43
    %s45 = sphi 0, %s43
    %s46 = sphi 0, %s45
    %s60 = sphi 0, %s46
    %s64 = sphi 0, %s64
    %s66 = sphi 0, %s64
    %s67 = sphi 0, %s66
    %s81 = sphi 0, %s67
    %s87 = sphi 0, %s89
    %s90 = sphi 0, %s87
    %s91 = sphi 0, %s90
    %s107 = sphi 0, %s91
  $region4: #{tpu_custom_call.1} parent=0 // loop_header_branch
    %12 = sbr.rel (%p10) target = $region8
  $region5: #{tpu_custom_call.1} parent=0 // loop_body
    %s14 = ssub.s32 %s9, 1
    %s15 = ssub.s32 %s9, 2
    %s16 = sadd.s32 %s9, 1
    %s17 = ssub.s32 %s9, %s16
    %p18 = scmp.eq.s32.totalorder %s17, 0
    %s20 = sadd.s32 %s19, 1
    %s21 = scalar_select %p18, %s19, %s20
    %p24 = pneg %p18
    %p25 = scmp.eq.s32.totalorder %s9, 1
    %p26 = por %p24, %p25
    %p27 = scmp.ne.s32.totalorder %s19, %s22
    %p28 = scmp.eq.s32.totalorder %s9, 0
    %p29 = por %p27, %p28
    %p30 = scmp.ne.s32.totalorder %s19, %s22
    %p31 = scmp.eq.s32.totalorder %s14, 1
    %p32 = por %p30, %p31
    %p33 = scmp.ne.s32.totalorder %s22, %s23
    %p34 = scmp.eq.s32.totalorder %s14, 0
    %p35 = por %p33, %p34
    %p36 = scmp.ne.s32.totalorder %s22, %s23
    %p37 = scmp.eq.s32.totalorder %s15, 1
    %p38 = por %p36, %p37
    %p40 = scmp.ne.s32.totalorder %s23, %s39
    %p41 = scmp.eq.s32.totalorder %s15, 0
    %p42 = por %p40, %p41
    %s44 = sadd.s32 %s43, 1
    %p47 = scmp.eq.s32.totalorder %s9, 1
    %p48 = scmp.ne.s32.totalorder %s43, %s45
    %p49 = scmp.eq.s32.totalorder %s9, 0
    %p50 = por %p48, %p49
    %p51 = scmp.ne.s32.totalorder %s43, %s45
    %p52 = scmp.eq.s32.totalorder %s14, 1
    %p53 = por %p51, %p52
    %p54 = scmp.ne.s32.totalorder %s45, %s46
    %p55 = scmp.eq.s32.totalorder %s14, 0
    %p56 = por %p54, %p55
    %p57 = scmp.ne.s32.totalorder %s45, %s46
    %p58 = scmp.eq.s32.totalorder %s15, 1
    %p59 = por %p57, %p58
    %p61 = scmp.ne.s32.totalorder %s46, %s60
    %p62 = scmp.eq.s32.totalorder %s15, 0
    %p63 = por %p61, %p62
    %s65 = sadd.s32 %s64, 1
    %p68 = scmp.eq.s32.totalorder %s9, 1
    %p69 = scmp.ne.s32.totalorder %s64, %s66
    %p70 = scmp.eq.s32.totalorder %s9, 0
    %p71 = por %p69, %p70
    %p72 = scmp.ne.s32.totalorder %s64, %s66
    %p73 = scmp.eq.s32.totalorder %s14, 1
    %p74 = por %p72, %p73
    %p75 = scmp.ne.s32.totalorder %s66, %s67
    %p76 = scmp.eq.s32.totalorder %s14, 0
    %p77 = por %p75, %p76
    %p78 = scmp.ne.s32.totalorder %s66, %s67
    %p79 = scmp.eq.s32.totalorder %s15, 1
    %p80 = por %p78, %p79
    %p82 = scmp.ne.s32.totalorder %s67, %s81
    %p83 = scmp.eq.s32.totalorder %s15, 0
    %p84 = por %p82, %p83
    %s85 = ssub.s32 %s9, %s16
    %p86 = scmp.eq.s32.totalorder %s85, 0
    %s88 = sadd.s32 %s87, 1
    %s89 = scalar_select %p86, %s87, %s88
    %p92 = pneg %p86
    %p93 = scmp.eq.s32.totalorder %s9, 1
    %p94 = por %p92, %p93
    %p95 = scmp.ne.s32.totalorder %s87, %s90
    %p96 = scmp.eq.s32.totalorder %s9, 0
    %p97 = por %p95, %p96
    %p98 = scmp.ne.s32.totalorder %s87, %s90
    %p99 = scmp.eq.s32.totalorder %s14, 1
    %p100 = por %p98, %p99
    %p101 = scmp.ne.s32.totalorder %s90, %s91
    %p102 = scmp.eq.s32.totalorder %s14, 0
    %p103 = por %p101, %p102
    %p104 = scmp.ne.s32.totalorder %s90, %s91
    %p105 = scmp.eq.s32.totalorder %s15, 1
    %p106 = por %p104, %p105
    %p108 = scmp.ne.s32.totalorder %s91, %s107
    %p109 = scmp.eq.s32.totalorder %s15, 0
    %p110 = por %p108, %p109
    %p111 = scmp.le.s32.totalorder 1, %s9
    %p112 = scmp.lt.s32.totalorder %s9, 3
    %p113 = pnand %p111, %p112
    %p114 = pneg %p113
    // Predicated region
    $region9: #{tpu_custom_call.1} parent=5 // pred_check
      _
    $region10: #{tpu_custom_call.1} parent=5 // pred_check_branch
      %116 = sbr.rel (%p113) target = $region12
    $region11: #{tpu_custom_call.1} parent=5 // pred_region
      %s117 = ssub.s32 %s9, 1
      // Predicated region
      $region13: #{tpu_custom_call.1} parent=11 // pred_check
        %p118 = pneg %p56
      $region14: #{tpu_custom_call.1} parent=11 // pred_check_branch
        %120 = sbr.rel (%p118) target = $region16
      $region15: #{tpu_custom_call.1} parent=11 // pred_region
        _
      $region16: #{tpu_custom_call.1} parent=11 // pred_fallthru
        _
      // Predicated region
      $region17: #{tpu_custom_call.1} parent=11 // pred_check
        %p121 = pneg %p77
      $region18: #{tpu_custom_call.1} parent=11 // pred_check_branch
        %123 = sbr.rel (%p121) target = $region20
      $region19: #{tpu_custom_call.1} parent=11 // pred_region
        _
      $region20: #{tpu_custom_call.1} parent=11 // pred_fallthru
        _
    $region12: #{tpu_custom_call.1} parent=5 // pred_fallthru
      _
    %p124 = scmp.lt.s32.totalorder %s9, 2
    // Predicated region
    $region21: #{tpu_custom_call.1} parent=5 // pred_check
      %p125 = pneg %p124
    $region22: #{tpu_custom_call.1} parent=5 // pred_check_branch
      %127 = sbr.rel (%p125) target = $region24
    $region23: #{tpu_custom_call.1} parent=5 // pred_region
      // Predicated region
      $region25: #{tpu_custom_call.1} parent=23 // pred_check
        %p128 = pneg %p29
      $region26: #{tpu_custom_call.1} parent=23 // pred_check_branch
        %130 = sbr.rel (%p128) target = $region28
      $region27: #{tpu_custom_call.1} parent=23 // pred_region
        %s131 = smul.u32 19, %s9
        %p132 = scmp.lt.s32.totalorder %s131, 37
        %s133 = scalar_select %p132, %s131, 37
        %s134 = smul.addr %s133, 8
        %s135 = scalar_lea.vmem %s0, %s134
        %s136 = smul.u32 19, %s9
      $region28: #{tpu_custom_call.1} parent=23 // pred_fallthru
        _
    $region24: #{tpu_custom_call.1} parent=5 // pred_fallthru
      _
    %p137 = scmp.le.s32.totalorder 1, %s9
    %p138 = scmp.lt.s32.totalorder %s9, 3
    %p139 = pnand %p137, %p138
    %p140 = pneg %p139
    // Predicated region
    $region29: #{tpu_custom_call.1} parent=5 // pred_check
      _
    $region30: #{tpu_custom_call.1} parent=5 // pred_check_branch
      %142 = sbr.rel (%p139) target = $region32
    $region31: #{tpu_custom_call.1} parent=5 // pred_region
      %s143 = ssub.s32 %s9, 1
      %s144 = smul.u32 19, %s14
      %p145 = scmp.lt.s32.totalorder %s144, 37
      %s146 = scalar_select %p145, %s144, 37
      %s147 = smul.addr %s146, 8
      %s148 = scalar_lea.vmem %s0, %s147
      %p149 = pneg %p35
      %p150 = pneg %p32
      %p151 = pneg %p56
      %p152 = pneg %p53
      %p153 = pneg %p77
      %p154 = pneg %p74
      %p155 = pneg %p103
      %p156 = pneg %p100
      %s157 = smul.u32 19, %s14
      %p158 = scmp.lt.s32.totalorder %s157, 37
      %s159 = scalar_select %p158, %s157, 37
      %s160 = smul.addr %s159, 8
      %s161 = scalar_lea.vmem %s3, %s160
      %s162 = smul.u32 19, %s14
      %p163 = scmp.lt.s32.totalorder %s162, 37
      %s164 = scalar_select %p163, %s162, 37
      %s165 = smul.addr %s164, 8
      %s166 = scalar_lea.vmem %s0, %s165
      %s167 = smul.u32 19, %s14
      %s168 = smul.u32 19, %s14
      %p169 = scmp.lt.s32.totalorder %s168, 37
      %s170 = scalar_select %p169, %s168, 37
      %s171 = smul.addr %s170, 8
      %s172 = scalar_lea.vmem %s3, %s171
      %s173 = smul.u32 19, %s14
      %v174 = vld [vmem:[%s166] sm:$0xff]
      %v175 = vld [vmem:[%s166 + $0x8] sm:$0xff]
      %v176 = vld [vmem:[%s166 + $0x10] sm:$0xff]
      %v177 = vld [vmem:[%s166 + $0x18] sm:$0xff]
      %v178 = vld [vmem:[%s166 + $0x20] sm:$0xff]
      %v179 = vld [vmem:[%s166 + $0x28] sm:$0xff]
      %v180 = vld [vmem:[%s166 + $0x30] sm:$0xff]
      %v181 = vld [vmem:[%s166 + $0x38] sm:$0xff]
      %v182 = vld [vmem:[%s166 + $0x40] sm:$0xff]
      %v183 = vld [vmem:[%s166 + $0x48] sm:$0xff]
      %v184 = vld [vmem:[%s166 + $0x50] sm:$0xff]
      %v185 = vld [vmem:[%s166 + $0x58] sm:$0xff]
      %v186 = vld [vmem:[%s166 + $0x60] sm:$0xff]
      %v187 = vld [vmem:[%s166 + $0x68] sm:$0xff]
      %v188 = vld [vmem:[%s166 + $0x70] sm:$0xff]
      %v189 = vld [vmem:[%s166 + $0x78] sm:$0xff]
      %v190 = vld [vmem:[%s166 + $0x80] sm:$0xff]
      %v191 = vld [vmem:[%s166 + $0x88] sm:$0xff]
      %v192 = vld [vmem:[%s166 + $0x90] sm:$0xff]
      %vm193 = vcmask 523264
      %v194 = vsel %vm193, %v174, 0.0
      %195 = vadd.xlane.f32.xlu0 %v194
      %v196 = vpop.xlane.xlu0 %195
      %v197 = vsel %vm193, %v175, 0.0
      %198 = vadd.xlane.f32.xlu0 %v197
      %v199 = vpop.xlane.xlu0 %198
      %v200 = vsel %vm193, %v176, 0.0
      %201 = vadd.xlane.f32.xlu0 %v200
      %v202 = vpop.xlane.xlu0 %201
      %v203 = vsel %vm193, %v177, 0.0
      %204 = vadd.xlane.f32.xlu0 %v203
      %v205 = vpop.xlane.xlu0 %204
      %v206 = vsel %vm193, %v178, 0.0
      %207 = vadd.xlane.f32.xlu0 %v206
      %v208 = vpop.xlane.xlu0 %207
      %v209 = vsel %vm193, %v179, 0.0
      %210 = vadd.xlane.f32.xlu0 %v209
      %v211 = vpop.xlane.xlu0 %210
      %v212 = vsel %vm193, %v180, 0.0
      %213 = vadd.xlane.f32.xlu0 %v212
      %v214 = vpop.xlane.xlu0 %213
      %v215 = vsel %vm193, %v181, 0.0
      %216 = vadd.xlane.f32.xlu0 %v215
      %v217 = vpop.xlane.xlu0 %216
      %v218 = vsel %vm193, %v182, 0.0
      %219 = vadd.xlane.f32.xlu0 %v218
      %v220 = vpop.xlane.xlu0 %219
      %v221 = vsel %vm193, %v183, 0.0
      %222 = vadd.xlane.f32.xlu0 %v221
      %v223 = vpop.xlane.xlu0 %222
      %v224 = vsel %vm193, %v184, 0.0
      %225 = vadd.xlane.f32.xlu0 %v224
      %v226 = vpop.xlane.xlu0 %225
      %v227 = vsel %vm193, %v185, 0.0
      %228 = vadd.xlane.f32.xlu0 %v227
      %v229 = vpop.xlane.xlu0 %228
      %v230 = vsel %vm193, %v186, 0.0
      %231 = vadd.xlane.f32.xlu0 %v230
      %v232 = vpop.xlane.xlu0 %231
      %v233 = vsel %vm193, %v187, 0.0
      %234 = vadd.xlane.f32.xlu0 %v233
      %v235 = vpop.xlane.xlu0 %234
      %v236 = vsel %vm193, %v188, 0.0
      %237 = vadd.xlane.f32.xlu0 %v236
      %v238 = vpop.xlane.xlu0 %237
      %v239 = vsel %vm193, %v189, 0.0
      %240 = vadd.xlane.f32.xlu0 %v239
      %v241 = vpop.xlane.xlu0 %240
      %v242 = vsel %vm193, %v190, 0.0
      %243 = vadd.xlane.f32.xlu0 %v242
      %v244 = vpop.xlane.xlu0 %243
      %v245 = vsel %vm193, %v191, 0.0
      %246 = vadd.xlane.f32.xlu0 %v245
      %v247 = vpop.xlane.xlu0 %246
      %v248 = vsel %vm193, %v192, 0.0
      %249 = vadd.xlane.f32.xlu0 %v248
      %v250 = vpop.xlane.xlu0 %249
      %v251 = vrcp.pop 64.0
      %v252 = vmul.f32 %v196, %v251
      %v253 = vmul.f32 %v199, %v251
      %v254 = vmul.f32 %v202, %v251
      %v255 = vmul.f32 %v205, %v251
      %v256 = vmul.f32 %v208, %v251
      %v257 = vmul.f32 %v211, %v251
      %v258 = vmul.f32 %v214, %v251
      %v259 = vmul.f32 %v217, %v251
      %v260 = vmul.f32 %v220, %v251
      %v261 = vmul.f32 %v223, %v251
      %v262 = vmul.f32 %v226, %v251
      %v263 = vmul.f32 %v229, %v251
      %v264 = vmul.f32 %v232, %v251
      %v265 = vmul.f32 %v235, %v251
      %v266 = vmul.f32 %v238, %v251
      %v267 = vmul.f32 %v241, %v251
      %v268 = vmul.f32 %v244, %v251
      %v269 = vmul.f32 %v247, %v251
      %v270 = vmul.f32 %v250, %v251
      %v271 = vmul.f32 %v252, %v252
      %v272 = vmul.f32 %v253, %v253
      %v273 = vmul.f32 %v254, %v254
      %v274 = vmul.f32 %v255, %v255
      %v275 = vmul.f32 %v256, %v256
      %v276 = vmul.f32 %v257, %v257
      %v277 = vmul.f32 %v258, %v258
      %v278 = vmul.f32 %v259, %v259
      %v279 = vmul.f32 %v260, %v260
      %v280 = vmul.f32 %v261, %v261
      %v281 = vmul.f32 %v262, %v262
      %v282 = vmul.f32 %v263, %v263
      %v283 = vmul.f32 %v264, %v264
      %v284 = vmul.f32 %v265, %v265
      %v285 = vmul.f32 %v266, %v266
      %v286 = vmul.f32 %v267, %v267
      %v287 = vmul.f32 %v268, %v268
      %v288 = vmul.f32 %v269, %v269
      %v289 = vmul.f32 %v270, %v270
      %v290 = vsub.f32 %v252, 0.33
      %v291 = vsub.f32 %v253, 0.33
      %v292 = vsub.f32 %v254, 0.33
      %v293 = vsub.f32 %v255, 0.33
      %v294 = vsub.f32 %v256, 0.33
      %v295 = vsub.f32 %v257, 0.33
      %v296 = vsub.f32 %v258, 0.33
      %v297 = vsub.f32 %v259, 0.33
      %v298 = vsub.f32 %v260, 0.33
      %v299 = vsub.f32 %v261, 0.33
      %v300 = vsub.f32 %v262, 0.33
      %v301 = vsub.f32 %v263, 0.33
      %v302 = vsub.f32 %v264, 0.33
      %v303 = vsub.f32 %v265, 0.33
      %v304 = vsub.f32 %v266, 0.33
      %v305 = vsub.f32 %v267, 0.33
      %v306 = vsub.f32 %v268, 0.33
      %v307 = vsub.f32 %v269, 0.33
      %v308 = vsub.f32 %v270, 0.33
      %v309 = vmax.f32 %v290, 0.0
      %v310 = vmax.f32 %v291, 0.0
      %v311 = vmax.f32 %v292, 0.0
      %v312 = vmax.f32 %v293, 0.0
      %v313 = vmax.f32 %v294, 0.0
      %v314 = vmax.f32 %v295, 0.0
      %v315 = vmax.f32 %v296, 0.0
      %v316 = vmax.f32 %v297, 0.0
      %v317 = vmax.f32 %v298, 0.0
      %v318 = vmax.f32 %v299, 0.0
      %v319 = vmax.f32 %v300, 0.0
      %v320 = vmax.f32 %v301, 0.0
      %v321 = vmax.f32 %v302, 0.0
      %v322 = vmax.f32 %v303, 0.0
      %v323 = vmax.f32 %v304, 0.0
      %v324 = vmax.f32 %v305, 0.0
      %v325 = vmax.f32 %v306, 0.0
      %v326 = vmax.f32 %v307, 0.0
      %v327 = vmax.f32 %v308, 0.0
      %v328 = vmul.f32 %v309, %v309
      %v329 = vmul.f32 %v310, %v310
      %v330 = vmul.f32 %v311, %v311
      %v331 = vmul.f32 %v312, %v312
      %v332 = vmul.f32 %v313, %v313
      %v333 = vmul.f32 %v314, %v314
      %v334 = vmul.f32 %v315, %v315
      %v335 = vmul.f32 %v316, %v316
      %v336 = vmul.f32 %v317, %v317
      %v337 = vmul.f32 %v318, %v318
      %v338 = vmul.f32 %v319, %v319
      %v339 = vmul.f32 %v320, %v320
      %v340 = vmul.f32 %v321, %v321
      %v341 = vmul.f32 %v322, %v322
      %v342 = vmul.f32 %v323, %v323
      %v343 = vmul.f32 %v324, %v324
      %v344 = vmul.f32 %v325, %v325
      %v345 = vmul.f32 %v326, %v326
      %v346 = vmul.f32 %v327, %v327
      %v347 = vsub.f32 %v252, 0.66
      %v348 = vsub.f32 %v253, 0.66
      %v349 = vsub.f32 %v254, 0.66
      %v350 = vsub.f32 %v255, 0.66
      %v351 = vsub.f32 %v256, 0.66
      %v352 = vsub.f32 %v257, 0.66
      %v353 = vsub.f32 %v258, 0.66
      %v354 = vsub.f32 %v259, 0.66
      %v355 = vsub.f32 %v260, 0.66
      %v356 = vsub.f32 %v261, 0.66
      %v357 = vsub.f32 %v262, 0.66
      %v358 = vsub.f32 %v263, 0.66
      %v359 = vsub.f32 %v264, 0.66
      %v360 = vsub.f32 %v265, 0.66
      %v361 = vsub.f32 %v266, 0.66
      %v362 = vsub.f32 %v267, 0.66
      %v363 = vsub.f32 %v268, 0.66
      %v364 = vsub.f32 %v269, 0.66
      %v365 = vsub.f32 %v270, 0.66
      %v366 = vmax.f32 %v347, 0.0
      %v367 = vmax.f32 %v348, 0.0
      %v368 = vmax.f32 %v349, 0.0
      %v369 = vmax.f32 %v350, 0.0
      %v370 = vmax.f32 %v351, 0.0
      %v371 = vmax.f32 %v352, 0.0
      %v372 = vmax.f32 %v353, 0.0
      %v373 = vmax.f32 %v354, 0.0
      %v374 = vmax.f32 %v355, 0.0
      %v375 = vmax.f32 %v356, 0.0
      %v376 = vmax.f32 %v357, 0.0
      %v377 = vmax.f32 %v358, 0.0
      %v378 = vmax.f32 %v359, 0.0
      %v379 = vmax.f32 %v360, 0.0
      %v380 = vmax.f32 %v361, 0.0
      %v381 = vmax.f32 %v362, 0.0
      %v382 = vmax.f32 %v363, 0.0
      %v383 = vmax.f32 %v364, 0.0
      %v384 = vmax.f32 %v365, 0.0
      %v385 = vmul.f32 %v366, %v366
      %v386 = vmul.f32 %v367, %v367
      %v387 = vmul.f32 %v368, %v368
      %v388 = vmul.f32 %v369, %v369
      %v389 = vmul.f32 %v370, %v370
      %v390 = vmul.f32 %v371, %v371
      %v391 = vmul.f32 %v372, %v372
      %v392 = vmul.f32 %v373, %v373
      %v393 = vmul.f32 %v374, %v374
      %v394 = vmul.f32 %v375, %v375
      %v395 = vmul.f32 %v376, %v376
      %v396 = vmul.f32 %v377, %v377
      %v397 = vmul.f32 %v378, %v378
      %v398 = vmul.f32 %v379, %v379
      %v399 = vmul.f32 %v380, %v380
      %v400 = vmul.f32 %v381, %v381
      %v401 = vmul.f32 %v382, %v382
      %v402 = vmul.f32 %v383, %v383
      %v403 = vmul.f32 %v384, %v384
      %v404 = vld [vmem:[%s1] sm:$0xff]
      %v405 = vld [vmem:[%s1 + $0x8] sm:$0xff]
      %v406 = vld [vmem:[%s1 + $0x10] sm:$0xff]
      %v407 = vld [vmem:[%s1 + $0x18] sm:$0xff]
      %v408 = vld [vmem:[%s1 + $0x20] sm:$0xff]
      %v409 = vld [vmem:[%s1 + $0x28] sm:$0xff]
      %v410 = vld [vmem:[%s1 + $0x30] sm:$0xff]
      %v411 = vld [vmem:[%s1 + $0x38] sm:$0xff]
      %v412 = vld [vmem:[%s1 + $0x40] sm:$0xff]
      %v413 = vld [vmem:[%s1 + $0x48] sm:$0xff]
      %v414 = vld [vmem:[%s1 + $0x50] sm:$0xff]
      %v415 = vld [vmem:[%s1 + $0x58] sm:$0xff]
      %vm416 = vcmask 785408
      %v418 = vsel %vm416, %v174, 0
      %v421 = vsel %vm416, %v175, 0
      %v424 = vsel %vm416, %v176, 0
      %v427 = vsel %vm416, %v177, 0
      %v430 = vsel %vm416, %v178, 0
      %v433 = vsel %vm416, %v179, 0
      %v436 = vsel %vm416, %v180, 0
      %v439 = vsel %vm416, %v181, 0
      %v442 = vsel %vm416, %v182, 0
      %v445 = vsel %vm416, %v183, 0
      %v448 = vsel %vm416, %v184, 0
      %v451 = vsel %vm416, %v185, 0
      %v454 = vsel %vm416, %v186, 0
      %v457 = vsel %vm416, %v187, 0
      %v460 = vsel %vm416, %v188, 0
      %v463 = vsel %vm416, %v189, 0
      %v466 = vsel %vm416, %v190, 0
      %v469 = vsel %vm416, %v191, 0
      %v472 = vsel %vm416, %v192, 0
      %474 = vmatprep.subr.mxu0 0.0
      %475 = vmatpush1.msra.mxu0 %v404
      %476 = vmatprep.subr.mxu0 0.0
      %477 = vmatpush1.msra.mxu0 %v405
      %478 = vmatprep.subr.mxu0 0.0
      %479 = vmatpush1.msra.mxu0 %v406
      %480 = vmatprep.subr.mxu0 0.0
      %481 = vmatpush1.msra.mxu0 %v407
      %482 = vmatprep.subr.mxu0 0.0
      %483 = vmatpush1.msra.mxu0 %v408
      %484 = vmatprep.subr.mxu0 0.0
      %485 = vmatpush1.msra.mxu0 %v409
      %486 = vmatprep.subr.mxu0 0.0
      %487 = vmatpush1.msra.mxu0 %v410
      %488 = vmatprep.subr.mxu0 0.0
      %489 = vmatpush1.msra.mxu0 %v411
      %490 = vmatprep.subr.mxu0 0.0
      %491 = vmatpush1.msra.mxu0 %v412
      %492 = vmatprep.subr.mxu0 0.0
      %493 = vmatpush1.msra.mxu0 %v413
      %494 = vmatprep.subr.mxu0 0.0
      %495 = vmatpush1.msra.mxu0 %v414
      %496 = vmatprep.subr.mxu0 0.0
      %497 = vmatpush1.msra.mxu0 %v415
      %498 = vmatprep.subr.mxu0 0.0
      %499 = vmatpush1.msra.mxu0 0.0
      %500 = vmatprep.subr.mxu0 0.0
      %501 = vmatpush1.msra.mxu0 0.0
      %502 = vmatprep.subr.mxu0 0.0
      %503 = vmatpush1.msra.mxu0 0.0
      %504 = vmatprep.subr.mxu0 0.0
      %505 = vmatpush1.msra.mxu0 0.0
      %506 = vmatprep.subr.mxu0 0.0
      %507 = vmatpush1.msra.mxu0 0.0
      %508 = vmatprep.subr.mxu0 0.0
      %509 = vmatpush1.msra.mxu0 0.0
      %510 = vmatprep.subr.mxu0 0.0
      %511 = vmatpush1.msra.mxu0 0.0
      %512 = vmatprep.subr.mxu0 0.0
      %513 = vmatpush1.msra.mxu0 0.0
      %514 = vmatprep.subr.mxu0 0.0
      %515 = vmatpush1.msra.mxu0 0.0
      %516 = vmatprep.subr.mxu0 0.0
      %517 = vmatpush1.msra.mxu0 0.0
      %518 = vmatprep.subr.mxu0 0.0
      %519 = vmatpush1.msra.mxu0 0.0
      %520 = vmatprep.subr.mxu0 0.0
      %521 = vmatpush1.msra.mxu0 0.0
      %522 = vmatprep.subr.mxu0 0.0
      %523 = vmatpush1.msra.mxu0 0.0
      %524 = vmatprep.subr.mxu0 0.0
      %525 = vmatpush1.msra.mxu0 0.0
      %526 = vmatprep.subr.mxu0 0.0
      %527 = vmatpush1.msra.mxu0 0.0
      %528 = vmatprep.subr.mxu0 0.0
      %529 = vmatpush1.msra.mxu0 0.0
      %530 = vmatprep.subr.mxu0 0.0
      %531 = vmatpush1.msra.mxu0 0.0
      %532 = vmatprep.subr.mxu0 0.0
      %533 = vmatpush1.msra.mxu0 0.0
      %534 = vmatprep.subr.mxu0 0.0
      %535 = vmatpush1.msra.mxu0 0.0
      %536 = vmatprep.subr.mxu0 0.0
      %537 = vmatpush1.msra.mxu0 0.0
      %538 = vmatprep.mubr.f32.mxu0 0.0
      %539 = vmatmul.mubr.f32.gmra.mrb[0].mxu0 %v418
      %v540 = vpop.f32.mrb[0].mxu0
      %v541 = vadd.f32 0.0, %v540
      %v542 = vpop.f32.mrb[0].mxu0
      %543 = vmatprep.mubr.f32.mxu0 0.0
      %544 = vmatmul.mubr.f32.gmra.mrb[0].mxu0 %v421
      %v545 = vpop.f32.mrb[0].mxu0
      %v546 = vadd.f32 0.0, %v545
      %v547 = vpop.f32.mrb[0].mxu0
      %548 = vmatprep.mubr.f32.mxu0 0.0
      %549 = vmatmul.mubr.f32.gmra.mrb[0].mxu0 %v424
      %v550 = vpop.f32.mrb[0].mxu0
      %v551 = vadd.f32 0.0, %v550
      %v552 = vpop.f32.mrb[0].mxu0
      %553 = vmatprep.mubr.f32.mxu0 0.0
      %554 = vmatmul.mubr.f32.gmra.mrb[0].mxu0 %v427
      %v555 = vpop.f32.mrb[0].mxu0
      %v556 = vadd.f32 0.0, %v555
      %v557 = vpop.f32.mrb[0].mxu0
      %558 = vmatprep.mubr.f32.mxu0 0.0
      %559 = vmatmul.mubr.f32.gmra.mrb[0].mxu0 %v430
      %v560 = vpop.f32.mrb[0].mxu0
      %v561 = vadd.f32 0.0, %v560
      %v562 = vpop.f32.mrb[0].mxu0
      %563 = vmatprep.mubr.f32.mxu0 0.0
      %564 = vmatmul.mubr.f32.gmra.mrb[0].mxu0 %v433
      %v565 = vpop.f32.mrb[0].mxu0
      %v566 = vadd.f32 0.0, %v565
      %v567 = vpop.f32.mrb[0].mxu0
      %568 = vmatprep.mubr.f32.mxu0 0.0
      %569 = vmatmul.mubr.f32.gmra.mrb[0].mxu0 %v436
      %v570 = vpop.f32.mrb[0].mxu0
      %v571 = vadd.f32 0.0, %v570
      %v572 = vpop.f32.mrb[0].mxu0
      %573 = vmatprep.mubr.f32.mxu0 0.0
      %574 = vmatmul.mubr.f32.gmra.mrb[0].mxu0 %v439
      %v575 = vpop.f32.mrb[0].mxu0
      %v576 = vadd.f32 0.0, %v575
      %v577 = vpop.f32.mrb[0].mxu0
      %578 = vmatprep.mubr.f32.mxu0 0.0
      %579 = vmatmul.mubr.f32.gmra.mrb[0].mxu0 %v442
      %v580 = vpop.f32.mrb[0].mxu0
      %v581 = vadd.f32 0.0, %v580
      %v582 = vpop.f32.mrb[0].mxu0
      %583 = vmatprep.mubr.f32.mxu0 0.0
      %584 = vmatmul.mubr.f32.gmra.mrb[0].mxu0 %v445
      %v585 = vpop.f32.mrb[0].mxu0
      %v586 = vadd.f32 0.0, %v585
      %v587 = vpop.f32.mrb[0].mxu0
      %588 = vmatprep.mubr.f32.mxu0 0.0
      %589 = vmatmul.mubr.f32.gmra.mrb[0].mxu0 %v448
      %v590 = vpop.f32.mrb[0].mxu0
      %v591 = vadd.f32 0.0, %v590
      %v592 = vpop.f32.mrb[0].mxu0
      %593 = vmatprep.mubr.f32.mxu0 0.0
      %594 = vmatmul.mubr.f32.gmra.mrb[0].mxu0 %v451
      %v595 = vpop.f32.mrb[0].mxu0
      %v596 = vadd.f32 0.0, %v595
      %v597 = vpop.f32.mrb[0].mxu0
      %598 = vmatprep.mubr.f32.mxu0 0.0
      %599 = vmatmul.mubr.f32.gmra.mrb[0].mxu0 %v454
      %v600 = vpop.f32.mrb[0].mxu0
      %v601 = vadd.f32 0.0, %v600
      %v602 = vpop.f32.mrb[0].mxu0
      %603 = vmatprep.mubr.f32.mxu0 0.0
      %604 = vmatmul.mubr.f32.gmra.mrb[0].mxu0 %v457
      %v605 = vpop.f32.mrb[0].mxu0
      %v606 = vadd.f32 0.0, %v605
      %v607 = vpop.f32.mrb[0].mxu0
      %608 = vmatprep.mubr.f32.mxu0 0.0
      %609 = vmatmul.mubr.f32.gmra.mrb[0].mxu0 %v460
      %v610 = vpop.f32.mrb[0].mxu0
      %v611 = vadd.f32 0.0, %v610
      %v612 = vpop.f32.mrb[0].mxu0
      %613 = vmatprep.mubr.f32.mxu0 0.0
      %614 = vmatmul.mubr.f32.gmra.mrb[0].mxu0 %v463
      %v615 = vpop.f32.mrb[0].mxu0
      %v616 = vadd.f32 0.0, %v615
      %v617 = vpop.f32.mrb[0].mxu0
      %618 = vmatprep.mubr.f32.mxu0 0.0
      %619 = vmatmul.mubr.f32.gmra.mrb[0].mxu0 %v466
      %v620 = vpop.f32.mrb[0].mxu0
      %v621 = vadd.f32 0.0, %v620
      %v622 = vpop.f32.mrb[0].mxu0
      %623 = vmatprep.mubr.f32.mxu0 0.0
      %624 = vmatmul.mubr.f32.gmra.mrb[0].mxu0 %v469
      %v625 = vpop.f32.mrb[0].mxu0
      %v626 = vadd.f32 0.0, %v625
      %v627 = vpop.f32.mrb[0].mxu0
      %628 = vmatprep.mubr.f32.mxu0 0.0
      %629 = vmatmul.mubr.f32.gmra.mrb[0].mxu0 %v472
      %v630 = vpop.f32.mrb[0].mxu0
      %v631 = vadd.f32 0.0, %v630
      %v632 = vpop.f32.mrb[0].mxu0
      %633 = vdwg.mxu0
      %v634 = vld [vmem:[%s2] sm:$0x1]
      %v635 = vlaneseq
      %v636 = vshrl.u32 %v635, 7
      %v637 = vsub.s32 0, %v636
      %v638 = vrot.slane %v634, %v637
      %v639 = vadd.f32 %v541, %v638
      %v640 = vadd.f32 %v546, %v638
      %v641 = vadd.f32 %v551, %v638
      %v642 = vadd.f32 %v556, %v638
      %v643 = vadd.f32 %v561, %v638
      %v644 = vadd.f32 %v566, %v638
      %v645 = vadd.f32 %v571, %v638
      %v646 = vadd.f32 %v576, %v638
      %v647 = vadd.f32 %v581, %v638
      %v648 = vadd.f32 %v586, %v638
      %v649 = vadd.f32 %v591, %v638
      %v650 = vadd.f32 %v596, %v638
      %v651 = vadd.f32 %v601, %v638
      %v652 = vadd.f32 %v606, %v638
      %v653 = vadd.f32 %v611, %v638
      %v654 = vadd.f32 %v616, %v638
      %v655 = vadd.f32 %v621, %v638
      %v656 = vadd.f32 %v626, %v638
      %v657 = vadd.f32 %v631, %v638
      %v658 = vld [vmem:[%s2 + $0x1] sm:$0x1]
      %v659 = vlaneseq
      %v660 = vshrl.u32 %v659, 7
      %v661 = vsub.s32 0, %v660
      %v662 = vrot.slane %v658, %v661
      %664 = vrot.lane.b32.xlu0 %v662, 16
      %v665 = vpop.permute.xlu0 %664
      %v667 = vadd.f32 %v541, %v665
      %v668 = vadd.f32 %v546, %v665
      %v669 = vadd.f32 %v551, %v665
      %v670 = vadd.f32 %v556, %v665
      %v671 = vadd.f32 %v561, %v665
      %v672 = vadd.f32 %v566, %v665
      %v673 = vadd.f32 %v571, %v665
      %v674 = vadd.f32 %v576, %v665
      %v675 = vadd.f32 %v581, %v665
      %v676 = vadd.f32 %v586, %v665
      %v677 = vadd.f32 %v591, %v665
      %v678 = vadd.f32 %v596, %v665
      %v679 = vadd.f32 %v601, %v665
      %v680 = vadd.f32 %v606, %v665
      %v681 = vadd.f32 %v611, %v665
      %v682 = vadd.f32 %v616, %v665
      %v683 = vadd.f32 %v621, %v665
      %v684 = vadd.f32 %v626, %v665
      %v685 = vadd.f32 %v631, %v665
      %v686 = vmul.f32 %v252, %v667
      %v687 = vmul.f32 %v253, %v668
      %v688 = vmul.f32 %v254, %v669
      %v689 = vmul.f32 %v255, %v670
      %v690 = vmul.f32 %v256, %v671
      %v691 = vmul.f32 %v257, %v672
      %v692 = vmul.f32 %v258, %v673
      %v693 = vmul.f32 %v259, %v674
      %v694 = vmul.f32 %v260, %v675
      %v695 = vmul.f32 %v261, %v676
      %v696 = vmul.f32 %v262, %v677
      %v697 = vmul.f32 %v263, %v678
      %v698 = vmul.f32 %v264, %v679
      %v699 = vmul.f32 %v265, %v680
      %v700 = vmul.f32 %v266, %v681
      %v701 = vmul.f32 %v267, %v682
      %v702 = vmul.f32 %v268, %v683
      %v703 = vmul.f32 %v269, %v684
      %v704 = vmul.f32 %v270, %v685
      %724 = vrot.lane.b32.xlu0 %v686, 112
      %v725 = vpop.permute.xlu0 %724
      %726 = vrot.lane.b32.xlu0 %v687, 112
      %v727 = vpop.permute.xlu0 %726
      %728 = vrot.lane.b32.xlu0 %v688, 112
      %v729 = vpop.permute.xlu0 %728
      %730 = vrot.lane.b32.xlu0 %v689, 112
      %v731 = vpop.permute.xlu0 %730
      %732 = vrot.lane.b32.xlu0 %v690, 112
      %v733 = vpop.permute.xlu0 %732
      %734 = vrot.lane.b32.xlu0 %v691, 112
      %v735 = vpop.permute.xlu0 %734
      %736 = vrot.lane.b32.xlu0 %v692, 112
      %v737 = vpop.permute.xlu0 %736
      %738 = vrot.lane.b32.xlu0 %v693, 112
      %v739 = vpop.permute.xlu0 %738
      %740 = vrot.lane.b32.xlu0 %v694, 112
      %v741 = vpop.permute.xlu0 %740
      %742 = vrot.lane.b32.xlu0 %v695, 112
      %v743 = vpop.permute.xlu0 %742
      %744 = vrot.lane.b32.xlu0 %v696, 112
      %v745 = vpop.permute.xlu0 %744
      %746 = vrot.lane.b32.xlu0 %v697, 112
      %v747 = vpop.permute.xlu0 %746
      %748 = vrot.lane.b32.xlu0 %v698, 112
      %v749 = vpop.permute.xlu0 %748
      %750 = vrot.lane.b32.xlu0 %v699, 112
      %v751 = vpop.permute.xlu0 %750
      %752 = vrot.lane.b32.xlu0 %v700, 112
      %v753 = vpop.permute.xlu0 %752
      %754 = vrot.lane.b32.xlu0 %v701, 112
      %v755 = vpop.permute.xlu0 %754
      %756 = vrot.lane.b32.xlu0 %v702, 112
      %v757 = vpop.permute.xlu0 %756
      %758 = vrot.lane.b32.xlu0 %v703, 112
      %v759 = vpop.permute.xlu0 %758
      %760 = vrot.lane.b32.xlu0 %v704, 112
      %v761 = vpop.permute.xlu0 %760
      %v781 = vadd.f32 %v639, %v725
      %v782 = vadd.f32 %v640, %v727
      %v783 = vadd.f32 %v641, %v729
      %v784 = vadd.f32 %v642, %v731
      %v785 = vadd.f32 %v643, %v733
      %v786 = vadd.f32 %v644, %v735
      %v787 = vadd.f32 %v645, %v737
      %v788 = vadd.f32 %v646, %v739
      %v789 = vadd.f32 %v647, %v741
      %v790 = vadd.f32 %v648, %v743
      %v791 = vadd.f32 %v649, %v745
      %v792 = vadd.f32 %v650, %v747
      %v793 = vadd.f32 %v651, %v749
      %v794 = vadd.f32 %v652, %v751
      %v795 = vadd.f32 %v653, %v753
      %v796 = vadd.f32 %v654, %v755
      %v797 = vadd.f32 %v655, %v757
      %v798 = vadd.f32 %v656, %v759
      %v799 = vadd.f32 %v657, %v761
      %v800 = vld [vmem:[%s2 + $0x2] sm:$0x1]
      %v801 = vlaneseq
      %v802 = vshrl.u32 %v801, 7
      %v803 = vsub.s32 0, %v802
      %v804 = vrot.slane %v800, %v803
      %806 = vrot.lane.b32.xlu0 %v804, 32
      %v807 = vpop.permute.xlu0 %806
      %v809 = vadd.f32 %v541, %v807
      %v810 = vadd.f32 %v546, %v807
      %v811 = vadd.f32 %v551, %v807
      %v812 = vadd.f32 %v556, %v807
      %v813 = vadd.f32 %v561, %v807
      %v814 = vadd.f32 %v566, %v807
      %v815 = vadd.f32 %v571, %v807
      %v816 = vadd.f32 %v576, %v807
      %v817 = vadd.f32 %v581, %v807
      %v818 = vadd.f32 %v586, %v807
      %v819 = vadd.f32 %v591, %v807
      %v820 = vadd.f32 %v596, %v807
      %v821 = vadd.f32 %v601, %v807
      %v822 = vadd.f32 %v606, %v807
      %v823 = vadd.f32 %v611, %v807
      %v824 = vadd.f32 %v616, %v807
      %v825 = vadd.f32 %v621, %v807
      %v826 = vadd.f32 %v626, %v807
      %v827 = vadd.f32 %v631, %v807
      %v828 = vmul.f32 %v271, %v809
      %v829 = vmul.f32 %v272, %v810
      %v830 = vmul.f32 %v273, %v811
      %v831 = vmul.f32 %v274, %v812
      %v832 = vmul.f32 %v275, %v813
      %v833 = vmul.f32 %v276, %v814
      %v834 = vmul.f32 %v277, %v815
      %v835 = vmul.f32 %v278, %v816
      %v836 = vmul.f32 %v279, %v817
      %v837 = vmul.f32 %v280, %v818
      %v838 = vmul.f32 %v281, %v819
      %v839 = vmul.f32 %v282, %v820
      %v840 = vmul.f32 %v283, %v821
      %v841 = vmul.f32 %v284, %v822
      %v842 = vmul.f32 %v285, %v823
      %v843 = vmul.f32 %v286, %v824
      %v844 = vmul.f32 %v287, %v825
      %v845 = vmul.f32 %v288, %v826
      %v846 = vmul.f32 %v289, %v827
      %866 = vrot.lane.b32.xlu0 %v828, 96
      %v867 = vpop.permute.xlu0 %866
      %868 = vrot.lane.b32.xlu0 %v829, 96
      %v869 = vpop.permute.xlu0 %868
      %870 = vrot.lane.b32.xlu0 %v830, 96
      %v871 = vpop.permute.xlu0 %870
      %872 = vrot.lane.b32.xlu0 %v831, 96
      %v873 = vpop.permute.xlu0 %872
      %874 = vrot.lane.b32.xlu0 %v832, 96
      %v875 = vpop.permute.xlu0 %874
      %876 = vrot.lane.b32.xlu0 %v833, 96
      %v877 = vpop.permute.xlu0 %876
      %878 = vrot.lane.b32.xlu0 %v834, 96
      %v879 = vpop.permute.xlu0 %878
      %880 = vrot.lane.b32.xlu0 %v835, 96
      %v881 = vpop.permute.xlu0 %880
      %882 = vrot.lane.b32.xlu0 %v836, 96
      %v883 = vpop.permute.xlu0 %882
      %884 = vrot.lane.b32.xlu0 %v837, 96
      %v885 = vpop.permute.xlu0 %884
      %886 = vrot.lane.b32.xlu0 %v838, 96
      %v887 = vpop.permute.xlu0 %886
      %888 = vrot.lane.b32.xlu0 %v839, 96
      %v889 = vpop.permute.xlu0 %888
      %890 = vrot.lane.b32.xlu0 %v840, 96
      %v891 = vpop.permute.xlu0 %890
      %892 = vrot.lane.b32.xlu0 %v841, 96
      %v893 = vpop.permute.xlu0 %892
      %894 = vrot.lane.b32.xlu0 %v842, 96
      %v895 = vpop.permute.xlu0 %894
      %896 = vrot.lane.b32.xlu0 %v843, 96
      %v897 = vpop.permute.xlu0 %896
      %898 = vrot.lane.b32.xlu0 %v844, 96
      %v899 = vpop.permute.xlu0 %898
      %900 = vrot.lane.b32.xlu0 %v845, 96
      %v901 = vpop.permute.xlu0 %900
      %902 = vrot.lane.b32.xlu0 %v846, 96
      %v903 = vpop.permute.xlu0 %902
      %v923 = vadd.f32 %v781, %v867
      %v924 = vadd.f32 %v782, %v869
      %v925 = vadd.f32 %v783, %v871
      %v926 = vadd.f32 %v784, %v873
      %v927 = vadd.f32 %v785, %v875
      %v928 = vadd.f32 %v786, %v877
      %v929 = vadd.f32 %v787, %v879
      %v930 = vadd.f32 %v788, %v881
      %v931 = vadd.f32 %v789, %v883
      %v932 = vadd.f32 %v790, %v885
      %v933 = vadd.f32 %v791, %v887
      %v934 = vadd.f32 %v792, %v889
      %v935 = vadd.f32 %v793, %v891
      %v936 = vadd.f32 %v794, %v893
      %v937 = vadd.f32 %v795, %v895
      %v938 = vadd.f32 %v796, %v897
      %v939 = vadd.f32 %v797, %v899
      %v940 = vadd.f32 %v798, %v901
      %v941 = vadd.f32 %v799, %v903
      %v942 = vld [vmem:[%s2 + $0x3] sm:$0x1]
      %v943 = vlaneseq
      %v944 = vshrl.u32 %v943, 7
      %v945 = vsub.s32 0, %v944
      %v946 = vrot.slane %v942, %v945
      %948 = vrot.lane.b32.xlu0 %v946, 48
      %v949 = vpop.permute.xlu0 %948
      %v951 = vadd.f32 %v541, %v949
      %v952 = vadd.f32 %v546, %v949
      %v953 = vadd.f32 %v551, %v949
      %v954 = vadd.f32 %v556, %v949
      %v955 = vadd.f32 %v561, %v949
      %v956 = vadd.f32 %v566, %v949
      %v957 = vadd.f32 %v571, %v949
      %v958 = vadd.f32 %v576, %v949
      %v959 = vadd.f32 %v581, %v949
      %v960 = vadd.f32 %v586, %v949
      %v961 = vadd.f32 %v591, %v949
      %v962 = vadd.f32 %v596, %v949
      %v963 = vadd.f32 %v601, %v949
      %v964 = vadd.f32 %v606, %v949
      %v965 = vadd.f32 %v611, %v949
      %v966 = vadd.f32 %v616, %v949
      %v967 = vadd.f32 %v621, %v949
      %v968 = vadd.f32 %v626, %v949
      %v969 = vadd.f32 %v631, %v949
      %v970 = vmul.f32 %v328, %v951
      %v971 = vmul.f32 %v329, %v952
      %v972 = vmul.f32 %v330, %v953
      %v973 = vmul.f32 %v331, %v954
      %v974 = vmul.f32 %v332, %v955
      %v975 = vmul.f32 %v333, %v956
      %v976 = vmul.f32 %v334, %v957
      %v977 = vmul.f32 %v335, %v958
      %v978 = vmul.f32 %v336, %v959
      %v979 = vmul.f32 %v337, %v960
      %v980 = vmul.f32 %v338, %v961
      %v981 = vmul.f32 %v339, %v962
      %v982 = vmul.f32 %v340, %v963
      %v983 = vmul.f32 %v341, %v964
      %v984 = vmul.f32 %v342, %v965
      %v985 = vmul.f32 %v343, %v966
      %v986 = vmul.f32 %v344, %v967
      %v987 = vmul.f32 %v345, %v968
      %v988 = vmul.f32 %v346, %v969
      %1008 = vrot.lane.b32.xlu0 %v970, 80
      %v1009 = vpop.permute.xlu0 %1008
      %1010 = vrot.lane.b32.xlu0 %v971, 80
      %v1011 = vpop.permute.xlu0 %1010
      %1012 = vrot.lane.b32.xlu0 %v972, 80
      %v1013 = vpop.permute.xlu0 %1012
      %1014 = vrot.lane.b32.xlu0 %v973, 80
      %v1015 = vpop.permute.xlu0 %1014
      %1016 = vrot.lane.b32.xlu0 %v974, 80
      %v1017 = vpop.permute.xlu0 %1016
      %1018 = vrot.lane.b32.xlu0 %v975, 80
      %v1019 = vpop.permute.xlu0 %1018
      %1020 = vrot.lane.b32.xlu0 %v976, 80
      %v1021 = vpop.permute.xlu0 %1020
      %1022 = vrot.lane.b32.xlu0 %v977, 80
      %v1023 = vpop.permute.xlu0 %1022
      %1024 = vrot.lane.b32.xlu0 %v978, 80
      %v1025 = vpop.permute.xlu0 %1024
      %1026 = vrot.lane.b32.xlu0 %v979, 80
      %v1027 = vpop.permute.xlu0 %1026
      %1028 = vrot.lane.b32.xlu0 %v980, 80
      %v1029 = vpop.permute.xlu0 %1028
      %1030 = vrot.lane.b32.xlu0 %v981, 80
      %v1031 = vpop.permute.xlu0 %1030
      %1032 = vrot.lane.b32.xlu0 %v982, 80
      %v1033 = vpop.permute.xlu0 %1032
      %1034 = vrot.lane.b32.xlu0 %v983, 80
      %v1035 = vpop.permute.xlu0 %1034
      %1036 = vrot.lane.b32.xlu0 %v984, 80
      %v1037 = vpop.permute.xlu0 %1036
      %1038 = vrot.lane.b32.xlu0 %v985, 80
      %v1039 = vpop.permute.xlu0 %1038
      %1040 = vrot.lane.b32.xlu0 %v986, 80
      %v1041 = vpop.permute.xlu0 %1040
      %1042 = vrot.lane.b32.xlu0 %v987, 80
      %v1043 = vpop.permute.xlu0 %1042
      %1044 = vrot.lane.b32.xlu0 %v988, 80
      %v1045 = vpop.permute.xlu0 %1044
      %v1065 = vadd.f32 %v923, %v1009
      %v1066 = vadd.f32 %v924, %v1011
      %v1067 = vadd.f32 %v925, %v1013
      %v1068 = vadd.f32 %v926, %v1015
      %v1069 = vadd.f32 %v927, %v1017
      %v1070 = vadd.f32 %v928, %v1019
      %v1071 = vadd.f32 %v929, %v1021
      %v1072 = vadd.f32 %v930, %v1023
      %v1073 = vadd.f32 %v931, %v1025
      %v1074 = vadd.f32 %v932, %v1027
      %v1075 = vadd.f32 %v933, %v1029
      %v1076 = vadd.f32 %v934, %v1031
      %v1077 = vadd.f32 %v935, %v1033
      %v1078 = vadd.f32 %v936, %v1035
      %v1079 = vadd.f32 %v937, %v1037
      %v1080 = vadd.f32 %v938, %v1039
      %v1081 = vadd.f32 %v939, %v1041
      %v1082 = vadd.f32 %v940, %v1043
      %v1083 = vadd.f32 %v941, %v1045
      %v1084 = vld [vmem:[%s2 + $0x4] sm:$0x1]
      %v1085 = vlaneseq
      %v1086 = vshrl.u32 %v1085, 7
      %v1087 = vsub.s32 0, %v1086
      %v1088 = vrot.slane %v1084, %v1087
      %1090 = vrot.lane.b32.xlu0 %v1088, 64
      %v1091 = vpop.permute.xlu0 %1090
      %v1093 = vadd.f32 %v541, %v1091
      %v1094 = vadd.f32 %v546, %v1091
      %v1095 = vadd.f32 %v551, %v1091
      %v1096 = vadd.f32 %v556, %v1091
      %v1097 = vadd.f32 %v561, %v1091
      %v1098 = vadd.f32 %v566, %v1091
      %v1099 = vadd.f32 %v571, %v1091
      %v1100 = vadd.f32 %v576, %v1091
      %v1101 = vadd.f32 %v581, %v1091
      %v1102 = vadd.f32 %v586, %v1091
      %v1103 = vadd.f32 %v591, %v1091
      %v1104 = vadd.f32 %v596, %v1091
      %v1105 = vadd.f32 %v601, %v1091
      %v1106 = vadd.f32 %v606, %v1091
      %v1107 = vadd.f32 %v611, %v1091
      %v1108 = vadd.f32 %v616, %v1091
      %v1109 = vadd.f32 %v621, %v1091
      %v1110 = vadd.f32 %v626, %v1091
      %v1111 = vadd.f32 %v631, %v1091
      %v1112 = vmul.f32 %v385, %v1093
      %v1113 = vmul.f32 %v386, %v1094
      %v1114 = vmul.f32 %v387, %v1095
      %v1115 = vmul.f32 %v388, %v1096
      %v1116 = vmul.f32 %v389, %v1097
      %v1117 = vmul.f32 %v390, %v1098
      %v1118 = vmul.f32 %v391, %v1099
      %v1119 = vmul.f32 %v392, %v1100
      %v1120 = vmul.f32 %v393, %v1101
      %v1121 = vmul.f32 %v394, %v1102
      %v1122 = vmul.f32 %v395, %v1103
      %v1123 = vmul.f32 %v396, %v1104
      %v1124 = vmul.f32 %v397, %v1105
      %v1125 = vmul.f32 %v398, %v1106
      %v1126 = vmul.f32 %v399, %v1107
      %v1127 = vmul.f32 %v400, %v1108
      %v1128 = vmul.f32 %v401, %v1109
      %v1129 = vmul.f32 %v402, %v1110
      %v1130 = vmul.f32 %v403, %v1111
      %1150 = vrot.lane.b32.xlu0 %v1112, 64
      %v1151 = vpop.permute.xlu0 %1150
      %1152 = vrot.lane.b32.xlu0 %v1113, 64
      %v1153 = vpop.permute.xlu0 %1152
      %1154 = vrot.lane.b32.xlu0 %v1114, 64
      %v1155 = vpop.permute.xlu0 %1154
      %1156 = vrot.lane.b32.xlu0 %v1115, 64
      %v1157 = vpop.permute.xlu0 %1156
      %1158 = vrot.lane.b32.xlu0 %v1116, 64
      %v1159 = vpop.permute.xlu0 %1158
      %1160 = vrot.lane.b32.xlu0 %v1117, 64
      %v1161 = vpop.permute.xlu0 %1160
      %1162 = vrot.lane.b32.xlu0 %v1118, 64
      %v1163 = vpop.permute.xlu0 %1162
      %1164 = vrot.lane.b32.xlu0 %v1119, 64
      %v1165 = vpop.permute.xlu0 %1164
      %1166 = vrot.lane.b32.xlu0 %v1120, 64
      %v1167 = vpop.permute.xlu0 %1166
      %1168 = vrot.lane.b32.xlu0 %v1121, 64
      %v1169 = vpop.permute.xlu0 %1168
      %1170 = vrot.lane.b32.xlu0 %v1122, 64
      %v1171 = vpop.permute.xlu0 %1170
      %1172 = vrot.lane.b32.xlu0 %v1123, 64
      %v1173 = vpop.permute.xlu0 %1172
      %1174 = vrot.lane.b32.xlu0 %v1124, 64
      %v1175 = vpop.permute.xlu0 %1174
      %1176 = vrot.lane.b32.xlu0 %v1125, 64
      %v1177 = vpop.permute.xlu0 %1176
      %1178 = vrot.lane.b32.xlu0 %v1126, 64
      %v1179 = vpop.permute.xlu0 %1178
      %1180 = vrot.lane.b32.xlu0 %v1127, 64
      %v1181 = vpop.permute.xlu0 %1180
      %1182 = vrot.lane.b32.xlu0 %v1128, 64
      %v1183 = vpop.permute.xlu0 %1182
      %1184 = vrot.lane.b32.xlu0 %v1129, 64
      %v1185 = vpop.permute.xlu0 %1184
      %1186 = vrot.lane.b32.xlu0 %v1130, 64
      %v1187 = vpop.permute.xlu0 %1186
      %v1207 = vadd.f32 %v1065, %v1151
      %v1208 = vadd.f32 %v1066, %v1153
      %v1209 = vadd.f32 %v1067, %v1155
      %v1210 = vadd.f32 %v1068, %v1157
      %v1211 = vadd.f32 %v1069, %v1159
      %v1212 = vadd.f32 %v1070, %v1161
      %v1213 = vadd.f32 %v1071, %v1163
      %v1214 = vadd.f32 %v1072, %v1165
      %v1215 = vadd.f32 %v1073, %v1167
      %v1216 = vadd.f32 %v1074, %v1169
      %v1217 = vadd.f32 %v1075, %v1171
      %v1218 = vadd.f32 %v1076, %v1173
      %v1219 = vadd.f32 %v1077, %v1175
      %v1220 = vadd.f32 %v1078, %v1177
      %v1221 = vadd.f32 %v1079, %v1179
      %v1222 = vadd.f32 %v1080, %v1181
      %v1223 = vadd.f32 %v1081, %v1183
      %v1224 = vadd.f32 %v1082, %v1185
      %v1225 = vadd.f32 %v1083, %v1187
      %v1226 = vmax.f32 %v1207, 0.0
      %v1227 = vmax.f32 %v1208, 0.0
      %v1228 = vmax.f32 %v1209, 0.0
      %v1229 = vmax.f32 %v1210, 0.0
      %v1230 = vmax.f32 %v1211, 0.0
      %v1231 = vmax.f32 %v1212, 0.0
      %v1232 = vmax.f32 %v1213, 0.0
      %v1233 = vmax.f32 %v1214, 0.0
      %v1234 = vmax.f32 %v1215, 0.0
      %v1235 = vmax.f32 %v1216, 0.0
      %v1236 = vmax.f32 %v1217, 0.0
      %v1237 = vmax.f32 %v1218, 0.0
      %v1238 = vmax.f32 %v1219, 0.0
      %v1239 = vmax.f32 %v1220, 0.0
      %v1240 = vmax.f32 %v1221, 0.0
      %v1241 = vmax.f32 %v1222, 0.0
      %v1242 = vmax.f32 %v1223, 0.0
      %v1243 = vmax.f32 %v1224, 0.0
      %v1244 = vmax.f32 %v1225, 0.0
      %1264 = vrot.lane.b32.xlu0 %v1226, 64
      %v1265 = vpop.permute.xlu0 %1264
      %1266 = vrot.lane.b32.xlu0 %v1227, 64
      %v1267 = vpop.permute.xlu0 %1266
      %1268 = vrot.lane.b32.xlu0 %v1228, 64
      %v1269 = vpop.permute.xlu0 %1268
      %1270 = vrot.lane.b32.xlu0 %v1229, 64
      %v1271 = vpop.permute.xlu0 %1270
      %1272 = vrot.lane.b32.xlu0 %v1230, 64
      %v1273 = vpop.permute.xlu0 %1272
      %1274 = vrot.lane.b32.xlu0 %v1231, 64
      %v1275 = vpop.permute.xlu0 %1274
      %1276 = vrot.lane.b32.xlu0 %v1232, 64
      %v1277 = vpop.permute.xlu0 %1276
      %1278 = vrot.lane.b32.xlu0 %v1233, 64
      %v1279 = vpop.permute.xlu0 %1278
      %1280 = vrot.lane.b32.xlu0 %v1234, 64
      %v1281 = vpop.permute.xlu0 %1280
      %1282 = vrot.lane.b32.xlu0 %v1235, 64
      %v1283 = vpop.permute.xlu0 %1282
      %1284 = vrot.lane.b32.xlu0 %v1236, 64
      %v1285 = vpop.permute.xlu0 %1284
      %1286 = vrot.lane.b32.xlu0 %v1237, 64
      %v1287 = vpop.permute.xlu0 %1286
      %1288 = vrot.lane.b32.xlu0 %v1238, 64
      %v1289 = vpop.permute.xlu0 %1288
      %1290 = vrot.lane.b32.xlu0 %v1239, 64
      %v1291 = vpop.permute.xlu0 %1290
      %1292 = vrot.lane.b32.xlu0 %v1240, 64
      %v1293 = vpop.permute.xlu0 %1292
      %1294 = vrot.lane.b32.xlu0 %v1241, 64
      %v1295 = vpop.permute.xlu0 %1294
      %1296 = vrot.lane.b32.xlu0 %v1242, 64
      %v1297 = vpop.permute.xlu0 %1296
      %1298 = vrot.lane.b32.xlu0 %v1243, 64
      %v1299 = vpop.permute.xlu0 %1298
      %1300 = vrot.lane.b32.xlu0 %v1244, 64
      %v1301 = vpop.permute.xlu0 %1300
      %v1321 = vsel %vm193, %v174, %v1265
      %v1322 = vsel %vm193, %v175, %v1267
      %v1323 = vsel %vm193, %v176, %v1269
      %v1324 = vsel %vm193, %v177, %v1271
      %v1325 = vsel %vm193, %v178, %v1273
      %v1326 = vsel %vm193, %v179, %v1275
      %v1327 = vsel %vm193, %v180, %v1277
      %v1328 = vsel %vm193, %v181, %v1279
      %v1329 = vsel %vm193, %v182, %v1281
      %v1330 = vsel %vm193, %v183, %v1283
      %v1331 = vsel %vm193, %v184, %v1285
      %v1332 = vsel %vm193, %v185, %v1287
      %v1333 = vsel %vm193, %v186, %v1289
      %v1334 = vsel %vm193, %v187, %v1291
      %v1335 = vsel %vm193, %v188, %v1293
      %v1336 = vsel %vm193, %v189, %v1295
      %v1337 = vsel %vm193, %v190, %v1297
      %v1338 = vsel %vm193, %v191, %v1299
      %v1339 = vsel %vm193, %v192, %v1301
      %vm1340 = vcmask 654336
      %1341 = vst.msk [vmem:[%s172] sm:$0xff] %vm1340, %v1321
      %1342 = vst.msk [vmem:[%s172 + $0x8] sm:$0xff] %vm1340, %v1322
      %1343 = vst.msk [vmem:[%s172 + $0x10] sm:$0xff] %vm1340, %v1323
      %1344 = vst.msk [vmem:[%s172 + $0x18] sm:$0xff] %vm1340, %v1324
      %1345 = vst.msk [vmem:[%s172 + $0x20] sm:$0xff] %vm1340, %v1325
      %1346 = vst.msk [vmem:[%s172 + $0x28] sm:$0xff] %vm1340, %v1326
      %1347 = vst.msk [vmem:[%s172 + $0x30] sm:$0xff] %vm1340, %v1327
      %1348 = vst.msk [vmem:[%s172 + $0x38] sm:$0xff] %vm1340, %v1328
      %1349 = vst.msk [vmem:[%s172 + $0x40] sm:$0xff] %vm1340, %v1329
      %1350 = vst.msk [vmem:[%s172 + $0x48] sm:$0xff] %vm1340, %v1330
      %1351 = vst.msk [vmem:[%s172 + $0x50] sm:$0xff] %vm1340, %v1331
      %1352 = vst.msk [vmem:[%s172 + $0x58] sm:$0xff] %vm1340, %v1332
      %1353 = vst.msk [vmem:[%s172 + $0x60] sm:$0xff] %vm1340, %v1333
      %1354 = vst.msk [vmem:[%s172 + $0x68] sm:$0xff] %vm1340, %v1334
      %1355 = vst.msk [vmem:[%s172 + $0x70] sm:$0xff] %vm1340, %v1335
      %1356 = vst.msk [vmem:[%s172 + $0x78] sm:$0xff] %vm1340, %v1336
      %1357 = vst.msk [vmem:[%s172 + $0x80] sm:$0xff] %vm1340, %v1337
      %1358 = vst.msk [vmem:[%s172 + $0x88] sm:$0xff] %vm1340, %v1338
      %1359 = vst.msk [vmem:[%s172 + $0x90] sm:$0xff] %vm1340, %v1339
      %s1360 = smul.u32 19, %s14
      %p1361 = scmp.lt.s32.totalorder %s1360, 37
      %s1362 = scalar_select %p1361, %s1360, 37
      %s1363 = smul.addr %s1362, 8
      %s1364 = scalar_lea.vmem %s3, %s1363
      // Predicated region
      $region33: #{tpu_custom_call.1} parent=31 // pred_check
        %p1365 = pneg %p100
      $region34: #{tpu_custom_call.1} parent=31 // pred_check_branch
        %1367 = sbr.rel (%p1365) target = $region36
      $region35: #{tpu_custom_call.1} parent=31 // pred_region
        %s1368 = smul.u32 19, %s14
      $region36: #{tpu_custom_call.1} parent=31 // pred_fallthru
        _
    $region32: #{tpu_custom_call.1} parent=5 // pred_fallthru
      _
    %p1369 = scmp.le.s32.totalorder 2, %s9
    // Predicated region
    $region37: #{tpu_custom_call.1} parent=5 // pred_check
      %p1370 = pneg %p1369
    $region38: #{tpu_custom_call.1} parent=5 // pred_check_branch
      %1372 = sbr.rel (%p1370) target = $region40
    $region39: #{tpu_custom_call.1} parent=5 // pred_region
      %s1373 = ssub.s32 %s9, 2
      // Predicated region
      $region41: #{tpu_custom_call.1} parent=39 // pred_check
        %p1374 = pneg %p106
      $region42: #{tpu_custom_call.1} parent=39 // pred_check_branch
        %1376 = sbr.rel (%p1374) target = $region44
      $region43: #{tpu_custom_call.1} parent=39 // pred_region
        %s1377 = smul.u32 19, %s15
        %p1378 = scmp.lt.s32.totalorder %s1377, 37
        %s1379 = scalar_select %p1378, %s1377, 37
        %s1380 = smul.addr %s1379, 8
        %s1381 = scalar_lea.vmem %s3, %s1380
      $region44: #{tpu_custom_call.1} parent=39 // pred_fallthru
        _
    $region40: #{tpu_custom_call.1} parent=5 // pred_fallthru
      _
  $region6: #{tpu_custom_call.1} parent=0 // loop_footer
    %s13 = sadd.s32 1, %s9
  $region7: #{tpu_custom_call.1} parent=0 // loop_footer_branch
    %8 = sbr.rel target = $region3
  $region8: #{tpu_custom_call.1} parent=0 // loop_exit
    _

</llo_original>
